<compile_context>
chip_gen: v7x
topology: tpu7x:2x2x1
jax: 0.10.0
libtpu: 0.0.40
codegen_flags: <defaults>
</compile_context>

<pallas_src>
import functools

import jax
import jax.numpy as jnp
from jax import lax
from jax.experimental import pallas as pl
from jax.experimental.pallas import tpu as pltpu

_ROW_TILE = 1024        # max rows per block (f32: 1024x512x4B = 2 MiB/operand)
_SUBLANE_GRANULE = 16   # tile granule; valid for both f32 (8) and bf16 (16)


def _lane_pattern(m4, vals):
    """f32 array (same shape as m4) taking vals[c] on lanes where lane%4 == c."""
    if vals[0] == vals[1] and vals[2] == vals[3]:
        return jnp.where(m4 < 2, jnp.float32(vals[0]), jnp.float32(vals[2]))
    out = jnp.full(m4.shape, vals[3], dtype=jnp.float32)
    out = jnp.where(m4 == 2, jnp.float32(vals[2]), out)
    out = jnp.where(m4 == 1, jnp.float32(vals[1]), out)
    out = jnp.where(m4 == 0, jnp.float32(vals[0]), out)
    return out


def _bbox_transform_kernel(boxes_ref, deltas_ref, out_ref, *, mean, std):
    b = boxes_ref[...].astype(jnp.float32)   # (T, L) interleaved [x1 y1 x2 y2|...]
    d = deltas_ref[...].astype(jnp.float32)  # (T, L) interleaved [dx dy dw dh|...]
    n_lane = b.shape[-1]

    # ---- Row-invariant lane constants, built once at (1, L) and broadcast. ----
    lane_idx = lax.broadcasted_iota(jnp.int32, (1, n_lane), dimension=1)
    m4 = lane_idx & 3
    is_lo = m4 < 2                                  # x1/y1 (resp. dx/dy) slots
    std_pat = _lane_pattern(m4, std)
    half = jnp.where(is_lo, jnp.float32(-0.5), jnp.float32(0.5))
    sign = jnp.where(is_lo, jnp.float32(1.0), jnp.float32(-1.0))

    # Roll-direction probe: each lane needs its partner 2 lanes away *within
    # the same anchor*.  Pick, per lane, whichever +/-2 lane rotation sources
    # the wanted partner index.  Running the probe on the (1, L) iota makes it
    # essentially free and keeps it correct regardless of the pltpu.roll
    # direction convention (wrapped edge lanes only feed the discarded branch).
    want = jnp.where(is_lo, lane_idx + 2, lane_idx - 2)
    rot_fwd = lambda v: pltpu.roll(v, shift=2, axis=1)
    rot_bwd = lambda v: pltpu.roll(v, shift=n_lane - 2, axis=1)
    use_fwd = rot_fwd(lane_idx) == want             # (1, L) bool

    # ---- Per-block data math (broadcasts (1, L) constants over sublanes). ----
    d = d * std_pat                                  # de-normalize deltas
    if any(v != 0.0 for v in mean):
        d = d + _lane_pattern(m4, mean)

    partner = lambda v: jnp.where(use_fwd, rot_fwd(v), rot_bwd(v))
    pb = partner(b)              # x2 at x1-lanes, x1 at x2-lanes, ...
    pd = partner(d)              # dw at dx-lanes, dx at dw-lanes, ...

    wh = (pb - b) * sign                         # w at x-lanes, h at y-lanes
    ctr = 0.5 * (b + pb)                         # ctr_x / ctr_y on every lane
    d_xy = jnp.where(is_lo, d, pd)               # dx/dy on every lane
    d_wh = jnp.where(is_lo, pd, d)               # dw/dh on every lane

    pred_ctr = ctr + d_xy * wh
    pred_wh = jnp.exp(d_wh) * wh
    out_ref[...] = (pred_ctr + half * pred_wh).astype(out_ref.dtype)


def _pick_row_tile(rows):
    """Largest useful row tile: capped for VMEM, >=2 grid steps when possible."""
    if rows <= _SUBLANE_GRANULE:
        return rows                       # full-dim block (always legal)
    half = -(-rows // 2)                  # split for v7x dual TensorCore
    half = -(-half // _SUBLANE_GRANULE) * _SUBLANE_GRANULE
    return min(_ROW_TILE, half)


def bbox_transform(boxes, deltas, mean=None, std=None):
    """RetinaNet box decode.  boxes, deltas: (B, N, 4) -> (B, N, 4)."""
    if mean is None:
        mean = (0.0, 0.0, 0.0, 0.0)
    if std is None:
        std = (0.1, 0.1, 0.2, 0.2)
    mean = tuple(float(v) for v in mean)
    std = tuple(float(v) for v in std)

    B, N, C = boxes.shape
    assert C == 4 and deltas.shape == boxes.shape

    # Keep f32 / bf16 inputs as-is (no wrapper cast pass); anything else -> f32.
    if (boxes.dtype == deltas.dtype
            and boxes.dtype in (jnp.dtype(jnp.float32), jnp.dtype(jnp.bfloat16))):
        io_dtype = boxes.dtype
    else:
        io_dtype = jnp.dtype(jnp.float32)
        boxes = boxes.astype(io_dtype)
        deltas = deltas.astype(io_dtype)

    total = B * N * 4
    boxes_f = boxes.reshape(-1)        # free contiguous reshape
    deltas_f = deltas.reshape(-1)

    # Widest lane count that tiles the flat array exactly -> no pad / slice.
    lane = None
    for cand in (512, 256, 128):
        if total % cand == 0:
            lane = cand
            break
    if lane is None:
        # Rare awkward size (B*N not a multiple of 32): pad fallback.
        lane = 128
        rows = pl.cdiv(total, lane)
        padded = rows * lane
        boxes_f = jnp.pad(boxes_f, (0, padded - total))
        deltas_f = jnp.pad(deltas_f, (0, padded - total))
    else:
        rows = total // lane
        padded = total

    boxes2d = boxes_f.reshape(rows, lane)
    deltas2d = deltas_f.reshape(rows, lane)

    row_tile = _pick_row_tile(rows)
    grid = (pl.cdiv(rows, row_tile),)
    spec = pl.BlockSpec((row_tile, lane), lambda i: (i, 0))

    out2d = pl.pallas_call(
        functools.partial(_bbox_transform_kernel, mean=mean, std=std),
        out_shape=jax.ShapeDtypeStruct((rows, lane), io_dtype),
        grid=grid,
        in_specs=[spec, spec],
        out_specs=spec,
        compiler_params=pltpu.CompilerParams(
            dimension_semantics=("parallel",)),
        cost_estimate=pl.CostEstimate(
            flops=25 * total,                 # ~25 VALU ops per coordinate
            transcendentals=total,            # exp on every interleaved lane
            bytes_accessed=3 * padded * jnp.dtype(io_dtype).itemsize),
    )(boxes2d, deltas2d)

    out_flat = out2d.reshape(-1)
    if padded != total:
        out_flat = out_flat[:total]
    return out_flat.reshape(B, N, 4)


def _reference(boxes, deltas, mean, std):
    widths = boxes[:, :, 2] - boxes[:, :, 0]
    heights = boxes[:, :, 3] - boxes[:, :, 1]
    ctr_x = boxes[:, :, 0] + 0.5 * widths
    ctr_y = boxes[:, :, 1] + 0.5 * heights
    dx = deltas[:, :, 0] * std[0] + mean[0]
    dy = deltas[:, :, 1] * std[1] + mean[1]
    dw = deltas[:, :, 2] * std[2] + mean[2]
    dh = deltas[:, :, 3] * std[3] + mean[3]
    pred_ctr_x = ctr_x + dx * widths
    pred_ctr_y = ctr_y + dy * heights
    pred_w = jnp.exp(dw) * widths
    pred_h = jnp.exp(dh) * heights
    return jnp.stack(
        [pred_ctr_x - 0.5 * pred_w, pred_ctr_y - 0.5 * pred_h,
         pred_ctr_x + 0.5 * pred_w, pred_ctr_y + 0.5 * pred_h],
        axis=2,
    )


if __name__ == "__main__":
    key = jax.random.PRNGKey(0)
    k1, k2, k3 = jax.random.split(key, 3)

    B, N = 2, 256  # batch, num anchors

    # Synthetic anchor boxes (x1, y1, x2, y2) with x2 > x1, y2 > y1.
    xy1 = jax.random.uniform(k1, (B, N, 2), dtype=jnp.float32) * 100.0
    wh = jax.random.uniform(k2, (B, N, 2), dtype=jnp.float32) * 50.0 + 1.0
    boxes = jnp.concatenate([xy1, xy1 + wh], axis=-1)

    # Regression deltas.
    deltas = jax.random.normal(k3, (B, N, 4), dtype=jnp.float32)

    out = jax.jit(bbox_transform)(boxes, deltas)
    jax.block_until_ready(out)

    ref = _reference(
        boxes, deltas,
        jnp.array([0.0, 0.0, 0.0, 0.0], dtype=jnp.float32),
        jnp.array([0.1, 0.1, 0.2, 0.2], dtype=jnp.float32))
    assert out.shape == (B, N, 4) and out.dtype == jnp.float32
    assert jnp.allclose(out, ref, rtol=1e-5, atol=1e-3)

    print("KERNEL_OK")
</pallas_src>

<mosaic_0001>
module attributes {stable_mosaic.version = 11 : i64} {
  func.func @_bbox_transform_kernel(%arg0: i32, %arg1: memref<4x512xf32, #tpu.memory_space<vmem>>, %arg2: memref<4x512xf32, #tpu.memory_space<vmem>>, %arg3: memref<4x512xf32, #tpu.memory_space<vmem>>) attributes {dimension_semantics = [#tpu.dimension_semantics<parallel>], iteration_bounds = array<i64: 1>, scalar_prefetch = 0 : i64, scratch_operands = 0 : i64, tpu.core_type = #tpu.core_type<tc>, window_params = [{transform_indices = @transform_0, window_bounds = array<i64: 4, 512>}, {transform_indices = @transform_1, window_bounds = array<i64: 4, 512>}, {transform_indices = @transform_2, window_bounds = array<i64: 4, 512>}]} {
    %c0 = arith.constant 0 : index
    %c0_0 = arith.constant 0 : index
    %0 = vector.load %arg1[%c0, %c0_0] : memref<4x512xf32, #tpu.memory_space<vmem>>, vector<4x512xf32>
    %c0_1 = arith.constant 0 : index
    %c0_2 = arith.constant 0 : index
    %1 = vector.load %arg2[%c0_1, %c0_2] : memref<4x512xf32, #tpu.memory_space<vmem>>, vector<4x512xf32>
    %2 = tpu.iota {dimensions = array<i32: 1>} : vector<1x512xi32>
    %c3_i32 = arith.constant 3 : i32
    %3 = vector.broadcast %c3_i32 : i32 to vector<1x512xi32>
    %4 = arith.andi %2, %3 : vector<1x512xi32>
    %c2_i32 = arith.constant 2 : i32
    %5 = vector.broadcast %c2_i32 : i32 to vector<1x512xi32>
    %6 = arith.cmpi slt, %4, %5 : vector<1x512xi32>
    %c2_i32_3 = arith.constant 2 : i32
    %7 = vector.broadcast %c2_i32_3 : i32 to vector<1x512xi32>
    %8 = arith.cmpi slt, %4, %7 : vector<1x512xi32>
    %cst = arith.constant 1.000000e-01 : f32
    %cst_4 = arith.constant 2.000000e-01 : f32
    %9 = vector.broadcast %cst : f32 to vector<1x512xf32>
    %10 = vector.broadcast %cst_4 : f32 to vector<1x512xf32>
    %11 = arith.select %8, %9, %10 : vector<1x512xi1>, vector<1x512xf32>
    %cst_5 = arith.constant -5.000000e-01 : f32
    %cst_6 = arith.constant 5.000000e-01 : f32
    %12 = vector.broadcast %cst_5 : f32 to vector<1x512xf32>
    %13 = vector.broadcast %cst_6 : f32 to vector<1x512xf32>
    %14 = arith.select %6, %12, %13 : vector<1x512xi1>, vector<1x512xf32>
    %cst_7 = arith.constant 1.000000e+00 : f32
    %cst_8 = arith.constant -1.000000e+00 : f32
    %15 = vector.broadcast %cst_7 : f32 to vector<1x512xf32>
    %16 = vector.broadcast %cst_8 : f32 to vector<1x512xf32>
    %17 = arith.select %6, %15, %16 : vector<1x512xi1>, vector<1x512xf32>
    %c2_i32_9 = arith.constant 2 : i32
    %18 = vector.broadcast %c2_i32_9 : i32 to vector<1x512xi32>
    %19 = arith.addi %2, %18 : vector<1x512xi32>
    %c2_i32_10 = arith.constant 2 : i32
    %20 = vector.broadcast %c2_i32_10 : i32 to vector<1x512xi32>
    %21 = arith.subi %2, %20 : vector<1x512xi32>
    %22 = arith.select %6, %19, %21 : vector<1x512xi1>, vector<1x512xi32>
    %c2_i32_11 = arith.constant 2 : i32
    %23 = tpu.dynamic_rotate %2 by %c2_i32_11 dim 1 : vector<1x512xi32>, i32 -> vector<1x512xi32>
    %24 = arith.cmpi eq, %23, %22 : vector<1x512xi32>
    %25 = vector.broadcast %11 : vector<1x512xf32> to vector<4x512xf32>
    %26 = arith.mulf %1, %25 : vector<4x512xf32>
    %c2_i32_12 = arith.constant 2 : i32
    %27 = tpu.dynamic_rotate %0 by %c2_i32_12 dim 1 : vector<4x512xf32>, i32 -> vector<4x512xf32>
    %c510_i32 = arith.constant 510 : i32
    %28 = tpu.dynamic_rotate %0 by %c510_i32 dim 1 : vector<4x512xf32>, i32 -> vector<4x512xf32>
    %29 = vector.shape_cast %24 : vector<1x512xi1> to vector<1x512xi1>
    %30 = vector.broadcast %29 : vector<1x512xi1> to vector<4x512xi1>
    %31 = arith.select %30, %27, %28 : vector<4x512xi1>, vector<4x512xf32>
    %c2_i32_13 = arith.constant 2 : i32
    %32 = tpu.dynamic_rotate %26 by %c2_i32_13 dim 1 : vector<4x512xf32>, i32 -> vector<4x512xf32>
    %c510_i32_14 = arith.constant 510 : i32
    %33 = tpu.dynamic_rotate %26 by %c510_i32_14 dim 1 : vector<4x512xf32>, i32 -> vector<4x512xf32>
    %34 = vector.shape_cast %24 : vector<1x512xi1> to vector<1x512xi1>
    %35 = vector.broadcast %34 : vector<1x512xi1> to vector<4x512xi1>
    %36 = arith.select %35, %32, %33 : vector<4x512xi1>, vector<4x512xf32>
    %37 = arith.subf %31, %0 : vector<4x512xf32>
    %38 = vector.broadcast %17 : vector<1x512xf32> to vector<4x512xf32>
    %39 = arith.mulf %37, %38 : vector<4x512xf32>
    %40 = arith.addf %0, %31 : vector<4x512xf32>
    %cst_15 = arith.constant 5.000000e-01 : f32
    %41 = vector.broadcast %cst_15 : f32 to vector<4x512xf32>
    %42 = arith.mulf %41, %40 : vector<4x512xf32>
    %43 = vector.shape_cast %6 : vector<1x512xi1> to vector<1x512xi1>
    %44 = vector.broadcast %43 : vector<1x512xi1> to vector<4x512xi1>
    %45 = arith.select %44, %26, %36 : vector<4x512xi1>, vector<4x512xf32>
    %46 = vector.shape_cast %6 : vector<1x512xi1> to vector<1x512xi1>
    %47 = vector.broadcast %46 : vector<1x512xi1> to vector<4x512xi1>
    %48 = arith.select %47, %36, %26 : vector<4x512xi1>, vector<4x512xf32>
    %49 = arith.mulf %45, %39 : vector<4x512xf32>
    %50 = arith.addf %42, %49 : vector<4x512xf32>
    %51 = math.exp %48 : vector<4x512xf32>
    %52 = arith.mulf %51, %39 : vector<4x512xf32>
    %53 = vector.broadcast %14 : vector<1x512xf32> to vector<4x512xf32>
    %54 = arith.mulf %53, %52 : vector<4x512xf32>
    %55 = arith.addf %50, %54 : vector<4x512xf32>
    %c0_16 = arith.constant 0 : index
    %c0_17 = arith.constant 0 : index
    %56 = vector.load %arg3[%c0_16, %c0_17] : memref<4x512xf32, #tpu.memory_space<vmem>>, vector<4x512xf32>
    tpu.vector_store %arg3[%c0_16, %c0_17], %55 {strides = array<i32>} : memref<4x512xf32, #tpu.memory_space<vmem>>, vector<4x512xf32>,
    return
  }
  func.func @transform_0(%arg0: i32) -> (i32, i32) {
    %c0_i32 = arith.constant 0 : i32
    %c0_i32_0 = arith.constant 0 : i32
    return %arg0, %c0_i32 : i32, i32
  }
  func.func @transform_1(%arg0: i32) -> (i32, i32) {
    %c0_i32 = arith.constant 0 : i32
    %c0_i32_0 = arith.constant 0 : i32
    return %arg0, %c0_i32 : i32, i32
  }
  func.func @transform_2(%arg0: i32) -> (i32, i32) {
    %c0_i32 = arith.constant 0 : i32
    %c0_i32_0 = arith.constant 0 : i32
    return %arg0, %c0_i32 : i32, i32
  }
}

</mosaic_0001>

<llo_original>
// kernel: bbox_transform.1
$region0: #{bbox_transform.1}
  #allocation0 [shape = 'u32[]', space=smem, size = 0x4, offset = 0x4, fixed_abs, tag = 'smem constant byte address 0x4 - core index']
  #allocation1 [shape = 'u32[144,128]{1,0:T(1,128)}', space=vmem, size = 0x12000, scoped, tag = 'internal scratch']
  %s0 = inlined_call_operand.vmem [shape: f32[4,512], index: 0, kind: input, shape index: {}]
  %s1 = inlined_call_operand.vmem [shape: f32[4,512], index: 1, kind: input, shape index: {}]
  %s2 = inlined_call_operand.vmem [shape: f32[4,512], index: 2, kind: output, shape index: {}]
  %s3 = sld [smem:[#allocation0]]
  $region18: #{bbox_transform.1} parent=0
    _
  %s5 = ssub.s32 1, %s3
  %s6 = scalar_select 0, %s5, %s3
  // Predicated region
  $region2: #{bbox_transform.1} parent=0 // pred_check
    _
  $region3: #{bbox_transform.1} parent=0 // pred_check_branch
    %8 = sbr.rel (0) target = $region5
  $region4: #{bbox_transform.1} parent=0 // pred_region
    _
  $region5: #{bbox_transform.1} parent=0 // pred_fallthru
    _
  // Predicated region
  $region6: #{bbox_transform.1} parent=0 // pred_check
    _
  $region7: #{bbox_transform.1} parent=0 // pred_check_branch
    %10 = sbr.rel (0) target = $region9
  $region8: #{bbox_transform.1} parent=0 // pred_region
    _
  $region9: #{bbox_transform.1} parent=0 // pred_fallthru
    _
  %v11 = vld [vmem:[%s0] sm:$0xff]
  %v12 = vld [vmem:[%s0 + $0x8] sm:$0xff]
  %v13 = vld [vmem:[%s1] sm:$0xff]
  %v14 = vld [vmem:[%s1 + $0x8] sm:$0xff]
  %v15 = vlaneseq
  %v16 = vand.u32 %v15, 127
  %v17 = vadd.s32 %v16, 128
  %v18 = vadd.s32 %v16, 256
  %v19 = vadd.s32 %v16, 384
  %v20 = vand.u32 %v16, 3
  %v21 = vand.u32 %v17, 3
  %v22 = vand.u32 %v18, 3
  %v23 = vand.u32 %v19, 3
  %vm24 = vcmp.lt.s32.totalorder %v20, 2
  %vm25 = vcmp.lt.s32.totalorder %v21, 2
  %vm26 = vcmp.lt.s32.totalorder %v22, 2
  %vm27 = vcmp.lt.s32.totalorder %v23, 2
  %v28 = vsel %vm24, 0.1, 0.2
  %v29 = vsel %vm25, 0.1, 0.2
  %v30 = vsel %vm26, 0.1, 0.2
  %v31 = vsel %vm27, 0.1, 0.2
  %v32 = vsel %vm24, -0.5, 0.5
  %v33 = vsel %vm25, -0.5, 0.5
  %v34 = vsel %vm26, -0.5, 0.5
  %v35 = vsel %vm27, -0.5, 0.5
  %v36 = vsel %vm24, 1.0, -1.0
  %v37 = vsel %vm25, 1.0, -1.0
  %v38 = vsel %vm26, 1.0, -1.0
  %v39 = vsel %vm27, 1.0, -1.0
  %v40 = vadd.s32 %v16, 2
  %v41 = vadd.s32 %v17, 2
  %v42 = vadd.s32 %v18, 2
  %v43 = vadd.s32 %v19, 2
  %v44 = vsub.s32 %v16, 2
  %v45 = vsub.s32 %v17, 2
  %v46 = vsub.s32 %v18, 2
  %v47 = vsub.s32 %v19, 2
  %v48 = vsel %vm24, %v40, %v44
  %v49 = vsel %vm25, %v41, %v45
  %v50 = vsel %vm26, %v42, %v46
  %v51 = vsel %vm27, %v43, %v47
  %52 = vrot.lane.b32.xlu0 %v16, 2
  %v53 = vpop.permute.xlu0 %52
  %54 = vrot.lane.b32.xlu0 %v17, 2
  %v55 = vpop.permute.xlu0 %54
  %56 = vrot.lane.b32.xlu0 %v18, 2
  %v57 = vpop.permute.xlu0 %56
  %58 = vrot.lane.b32.xlu0 %v19, 2
  %v59 = vpop.permute.xlu0 %58
  %vm60 = vcmp.lt.s32.totalorder %v16, 2
  %v61 = vsel %vm60, %v57, %v59
  %v62 = vsel %vm60, %v55, %v57
  %v63 = vsel %vm60, %v53, %v55
  %v64 = vsel %vm60, %v59, %v53
  %vm65 = vcmp.eq.s32.totalorder %v64, %v48
  %vm66 = vcmp.eq.s32.totalorder %v63, %v49
  %vm67 = vcmp.eq.s32.totalorder %v62, %v50
  %vm68 = vcmp.eq.s32.totalorder %v61, %v51
  %v73 = vcombine.low %v28, %v29
  %v74 = vcombine.low %v30, %v31
  %v77 = vmul.f32 %v13, %v73
  %v78 = vmul.f32 %v14, %v74
  %v81 = vcombine.high %v11, %v11
  %v82 = vcombine.high %v12, %v12
  %85 = vrot.lane.b32.xlu0 %v11, 2
  %v86 = vpop.permute.xlu0 %85
  %87 = vrot.lane.b32.xlu0 %v81, 2
  %v88 = vpop.permute.xlu0 %87
  %89 = vrot.lane.b32.xlu0 %v12, 2
  %v90 = vpop.permute.xlu0 %89
  %91 = vrot.lane.b32.xlu0 %v82, 2
  %v92 = vpop.permute.xlu0 %91
  %v93 = vsel %vm60, %v90, %v92
  %v94 = vsel %vm60, %v88, %v90
  %v95 = vsel %vm60, %v86, %v88
  %v96 = vsel %vm60, %v92, %v86
  %97 = vrot.lane.b32.xlu0 %v11, 126
  %v98 = vpop.permute.xlu0 %97
  %99 = vrot.lane.b32.xlu0 %v81, 126
  %v100 = vpop.permute.xlu0 %99
  %101 = vrot.lane.b32.xlu0 %v12, 126
  %v102 = vpop.permute.xlu0 %101
  %103 = vrot.lane.b32.xlu0 %v82, 126
  %v104 = vpop.permute.xlu0 %103
  %vm105 = vcmp.lt.s32.totalorder %v16, 126
  %v106 = vsel %vm105, %v102, %v104
  %v107 = vsel %vm105, %v100, %v102
  %v108 = vsel %vm105, %v98, %v100
  %v109 = vsel %vm105, %v104, %v98
  %v110 = vsel %vm65, 1, 0
  %v111 = vsel %vm66, 1, 0
  %v112 = vsel %vm67, 1, 0
  %v113 = vsel %vm68, 1, 0
  %v114 = vlaneseq
  %v115 = vshrl.u32 %v114, 7
  %v116 = vsub.s32 0, %v115
  %v117 = vrot.slane %v110, %v116
  %v118 = vlaneseq
  %v119 = vshrl.u32 %v118, 7
  %v120 = vsub.s32 0, %v119
  %v121 = vrot.slane %v111, %v120
  %v122 = vlaneseq
  %v123 = vshrl.u32 %v122, 7
  %v124 = vsub.s32 0, %v123
  %v125 = vrot.slane %v112, %v124
  %v126 = vlaneseq
  %v127 = vshrl.u32 %v126, 7
  %v128 = vsub.s32 0, %v127
  %v129 = vrot.slane %v113, %v128
  %vm130 = vcmp.eq.s32.totalorder %v117, 1
  %vm131 = vcmp.eq.s32.totalorder %v121, 1
  %vm132 = vcmp.eq.s32.totalorder %v125, 1
  %vm133 = vcmp.eq.s32.totalorder %v129, 1
  %v134 = vsel %vm130, %v96, %v108
  %v135 = vsel %vm131, %v95, %v107
  %v136 = vsel %vm132, %v94, %v106
  %v137 = vsel %vm133, %v93, %v109
  %v140 = vcombine.high %v77, %v77
  %v141 = vcombine.high %v78, %v78
  %144 = vrot.lane.b32.xlu0 %v77, 2
  %v145 = vpop.permute.xlu0 %144
  %146 = vrot.lane.b32.xlu0 %v140, 2
  %v147 = vpop.permute.xlu0 %146
  %148 = vrot.lane.b32.xlu0 %v78, 2
  %v149 = vpop.permute.xlu0 %148
  %150 = vrot.lane.b32.xlu0 %v141, 2
  %v151 = vpop.permute.xlu0 %150
  %v152 = vsel %vm60, %v149, %v151
  %v153 = vsel %vm60, %v147, %v149
  %v154 = vsel %vm60, %v145, %v147
  %v155 = vsel %vm60, %v151, %v145
  %156 = vrot.lane.b32.xlu0 %v77, 126
  %v157 = vpop.permute.xlu0 %156
  %158 = vrot.lane.b32.xlu0 %v140, 126
  %v159 = vpop.permute.xlu0 %158
  %160 = vrot.lane.b32.xlu0 %v78, 126
  %v161 = vpop.permute.xlu0 %160
  %162 = vrot.lane.b32.xlu0 %v141, 126
  %v163 = vpop.permute.xlu0 %162
  %v164 = vsel %vm105, %v161, %v163
  %v165 = vsel %vm105, %v159, %v161
  %v166 = vsel %vm105, %v157, %v159
  %v167 = vsel %vm105, %v163, %v157
  %v168 = vsel %vm130, %v155, %v166
  %v169 = vsel %vm131, %v154, %v165
  %v170 = vsel %vm132, %v153, %v164
  %v171 = vsel %vm133, %v152, %v167
  %v172 = vsub.f32 %v134, %v11
  %v173 = vsub.f32 %v135, %v81
  %v174 = vsub.f32 %v136, %v12
  %v175 = vsub.f32 %v137, %v82
  %v176 = vmul.f32 %v172, %v36
  %v177 = vmul.f32 %v173, %v37
  %v178 = vmul.f32 %v174, %v38
  %v179 = vmul.f32 %v175, %v39
  %v184 = vcombine.low %v134, %v135
  %v185 = vcombine.low %v136, %v137
  %v188 = vadd.f32 %v11, %v184
  %v189 = vadd.f32 %v12, %v185
  %v190 = vmul.f32 %v188, 0.5
  %v191 = vmul.f32 %v189, 0.5
  %v192 = vsel %vm24, 1, 0
  %v193 = vsel %vm25, 1, 0
  %v194 = vsel %vm26, 1, 0
  %v195 = vsel %vm27, 1, 0
  %vm196 = vcmp.eq.s32.totalorder %v192, 1
  %vm197 = vcmp.eq.s32.totalorder %v193, 1
  %vm198 = vcmp.eq.s32.totalorder %v194, 1
  %vm199 = vcmp.eq.s32.totalorder %v195, 1
  %v200 = vsel %vm196, %v77, %v168
  %v201 = vsel %vm197, %v140, %v169
  %v202 = vsel %vm198, %v78, %v170
  %v203 = vsel %vm199, %v141, %v171
  %v204 = vsel %vm196, %v168, %v77
  %v205 = vsel %vm197, %v169, %v140
  %v206 = vsel %vm198, %v170, %v78
  %v207 = vsel %vm199, %v171, %v141
  %v208 = vmul.f32 %v200, %v176
  %v209 = vmul.f32 %v201, %v177
  %v210 = vmul.f32 %v202, %v178
  %v211 = vmul.f32 %v203, %v179
  %v216 = vcombine.low %v208, %v209
  %v217 = vcombine.low %v210, %v211
  %v220 = vadd.f32 %v190, %v216
  %v221 = vadd.f32 %v191, %v217
  %v222 = vmul.f32 %v204, 1.442695
  %v223 = vpow.pop %v222
  %v224 = vmul.f32 %v205, 1.442695
  %v225 = vpow.pop %v224
  %v226 = vmul.f32 %v206, 1.442695
  %v227 = vpow.pop %v226
  %v228 = vmul.f32 %v207, 1.442695
  %v229 = vpow.pop %v228
  %v230 = vmul.f32 %v223, %v176
  %v231 = vmul.f32 %v225, %v177
  %v232 = vmul.f32 %v227, %v178
  %v233 = vmul.f32 %v229, %v179
  %v234 = vmul.f32 %v32, %v230
  %v235 = vmul.f32 %v33, %v231
  %v236 = vmul.f32 %v34, %v232
  %v237 = vmul.f32 %v35, %v233
  %v242 = vcombine.low %v234, %v235
  %v243 = vcombine.low %v236, %v237
  %v246 = vadd.f32 %v220, %v242
  %v247 = vadd.f32 %v221, %v243
  %248 = vst [vmem:[%s2] sm:$0xff] %v246
  %249 = vst [vmem:[%s2 + $0x8] sm:$0xff] %v247
  // Predicated region
  $region10: #{bbox_transform.1} parent=0 // pred_check
    _
  $region11: #{bbox_transform.1} parent=0 // pred_check_branch
    %251 = sbr.rel (0) target = $region13
  $region12: #{bbox_transform.1} parent=0 // pred_region
    _
  $region13: #{bbox_transform.1} parent=0 // pred_fallthru
    _
  // Predicated region
  $region14: #{bbox_transform.1} parent=0 // pred_check
    _
  $region15: #{bbox_transform.1} parent=0 // pred_check_branch
    %253 = sbr.rel (0) target = $region17
  $region16: #{bbox_transform.1} parent=0 // pred_region
    _
  $region17: #{bbox_transform.1} parent=0 // pred_fallthru
    _

</llo_original>
